<compile_context>
chip_gen: v6e
topology: v6e:2x2x1
jax: 0.10.0
libtpu: 0.0.40
codegen_flags: <defaults>
</compile_context>

<pallas_src>
import jax
import jax.numpy as jnp
from jax.experimental import pallas as pl
from jax.experimental.pallas import tpu as pltpu


def critic_kernel(x_ref, w1_ref, b1_ref, w2_ref, b2_ref, w3_ref, b3_ref, out_ref):
    # fc1 + relu  (bf16 operands, f32 accumulation on the MXU)
    x_bf16 = x_ref[...].astype(jnp.bfloat16)
    h1 = jnp.dot(x_bf16, w1_ref[...], preferred_element_type=jnp.float32)
    h1 = jnp.maximum(h1 + b1_ref[...], 0.0)

    # fc2 + relu
    h2 = jnp.dot(h1.astype(jnp.bfloat16), w2_ref[...],
                 preferred_element_type=jnp.float32)
    h2 = jnp.maximum(h2 + b2_ref[...], 0.0)

    # fc3 (value head) on the VPU/XLU: w3 is a (1, 256) f32 row.
    v = jnp.sum(h2 * w3_ref[...], axis=-1, keepdims=True) + b3_ref[...]  # (TB, 1)

    # Lane-dense store: broadcast the value across 128 lanes (full unmasked vst);
    # the wrapper keeps only column 0.
    out_ref[...] = jnp.broadcast_to(v, out_ref.shape).astype(out_ref.dtype)


def critic_forward(x, params):
    """x: (B, in_dim) float32.  params: dict with bf16 transposed weights, f32 biases,
    and w3 stored as a (1, 256) f32 row.  Returns (B, 1) float32."""
    w1, b1 = params["w1"], params["b1"]
    w2, b2 = params["w2"], params["b2"]
    w3, b3 = params["w3"], params["b3"]

    B, in_dim = x.shape
    hidden = w1.shape[1]

    # Rows per grid step: large tiles amortize per-step overhead; small batches
    # just round up to the 8-sublane granule.
    TB = 512 if B >= 512 else max(8, ((B + 7) // 8) * 8)
    n_tiles = (B + TB - 1) // TB
    B_pad = n_tiles * TB
    if B_pad != B:
        x = jnp.pad(x, ((0, B_pad - B), (0, 0)))

    param_bytes = sum(int(a.size) * a.dtype.itemsize
                      for a in (w1, b1, w2, b2, w3, b3))
    cost = pl.CostEstimate(
        flops=2 * B_pad * (in_dim * hidden + hidden * hidden + hidden),
        transcendentals=0,
        bytes_accessed=int(x.size) * x.dtype.itemsize + param_bytes + B_pad * 128 * 4,
    )

    resident = lambda shape: pl.BlockSpec(shape, lambda i: (0, 0))

    out = pl.pallas_call(
        critic_kernel,
        out_shape=jax.ShapeDtypeStruct((B_pad, 128), jnp.float32),
        grid=(n_tiles,),
        in_specs=[
            pl.BlockSpec((TB, in_dim), lambda i: (i, 0)),  # x tile, double-buffered
            resident(w1.shape),                            # w1 (in_dim, 256) bf16
            resident(b1.shape),                            # b1 (1, 256) f32
            resident(w2.shape),                            # w2 (256, 256) bf16
            resident(b2.shape),                            # b2 (1, 256) f32
            resident(w3.shape),                            # w3 (1, 256) f32
            resident(b3.shape),                            # b3 (1, 1) f32
        ],
        out_specs=pl.BlockSpec((TB, 128), lambda i: (i, 0)),
        compiler_params=pltpu.CompilerParams(
            dimension_semantics=("parallel",),
        ),
        cost_estimate=cost,
    )(x, w1, b1, w2, b2, w3, b3)

    return out[:B, :1]


def init_params(key, in_dim, hidden=256):
    """Init mimicking nn.Linear (uniform +/- 1/sqrt(fan_in)).
    fc1/fc2 weights stored transposed (in, out) in bf16 for the MXU;
    fc3 weight stored as a (1, hidden) f32 row for the VPU reduction."""
    ks = jax.random.split(key, 6)

    def linear(kw, kb, fan_in, fan_out):
        bound = float(fan_in) ** -0.5
        w = jax.random.uniform(kw, (fan_in, fan_out), jnp.float32, -bound, bound)
        b = jax.random.uniform(kb, (1, fan_out), jnp.float32, -bound, bound)
        return w, b

    w1, b1 = linear(ks[0], ks[1], in_dim, hidden)
    w2, b2 = linear(ks[2], ks[3], hidden, hidden)
    w3, b3 = linear(ks[4], ks[5], hidden, 1)
    return {
        "w1": w1.astype(jnp.bfloat16), "b1": b1,
        "w2": w2.astype(jnp.bfloat16), "b2": b2,
        "w3": w3.T,                    "b3": b3,   # (1, hidden) f32 row / (1, 1)
    }


def critic_ref(x, p):
    """Reference with the same bf16-operand / f32-accumulate math as the kernel."""
    h1 = jnp.dot(x.astype(jnp.bfloat16), p["w1"],
                 preferred_element_type=jnp.float32) + p["b1"]
    h1 = jnp.maximum(h1, 0.0)
    h2 = jnp.dot(h1.astype(jnp.bfloat16), p["w2"],
                 preferred_element_type=jnp.float32) + p["b2"]
    h2 = jnp.maximum(h2, 0.0)
    return jnp.sum(h2 * p["w3"], axis=-1, keepdims=True) + p["b3"]


if __name__ == "__main__":
    key = jax.random.PRNGKey(0)
    k_x, k_p = jax.random.split(key)

    batch, in_dim = 2, 32
    x = jax.random.normal(k_x, (batch, in_dim), jnp.float32)
    params = init_params(k_p, in_dim)

    value = jax.block_until_ready(critic_forward(x, params))
    ref = critic_ref(x, params)

    assert value.shape == (batch, 1), value.shape
    assert jnp.allclose(value, ref, atol=1e-3, rtol=1e-3), (value, ref)

    print("KERNEL_OK")
</pallas_src>

<mosaic_0001>
module attributes {stable_mosaic.version = 11 : i64} {
  func.func @critic_kernel(%arg0: i32, %arg1: memref<8x32xf32, #tpu.memory_space<vmem>>, %arg2: memref<32x256xbf16, #tpu.memory_space<vmem>>, %arg3: memref<1x256xf32, #tpu.memory_space<vmem>>, %arg4: memref<256x256xbf16, #tpu.memory_space<vmem>>, %arg5: memref<1x256xf32, #tpu.memory_space<vmem>>, %arg6: memref<1x256xf32, #tpu.memory_space<vmem>>, %arg7: memref<1x1xf32, #tpu.memory_space<vmem>>, %arg8: memref<8x128xf32, #tpu.memory_space<vmem>>) attributes {dimension_semantics = [#tpu.dimension_semantics<parallel>], iteration_bounds = array<i64: 1>, scalar_prefetch = 0 : i64, scratch_operands = 0 : i64, tpu.core_type = #tpu.core_type<tc>, window_params = [{transform_indices = @transform_0, window_bounds = array<i64: 8, 32>}, {pipeline_mode = #tpu.pipeline_mode<synchronous>, transform_indices = @transform_1, window_bounds = array<i64: 32, 256>}, {pipeline_mode = #tpu.pipeline_mode<synchronous>, transform_indices = @transform_2, window_bounds = array<i64: 1, 256>}, {pipeline_mode = #tpu.pipeline_mode<synchronous>, transform_indices = @transform_3, window_bounds = array<i64: 256, 256>}, {pipeline_mode = #tpu.pipeline_mode<synchronous>, transform_indices = @transform_4, window_bounds = array<i64: 1, 256>}, {pipeline_mode = #tpu.pipeline_mode<synchronous>, transform_indices = @transform_5, window_bounds = array<i64: 1, 256>}, {pipeline_mode = #tpu.pipeline_mode<synchronous>, transform_indices = @transform_6, window_bounds = array<i64: 1, 1>}, {transform_indices = @transform_7, window_bounds = array<i64: 8, 128>}]} {
    %c0 = arith.constant 0 : index
    %c0_0 = arith.constant 0 : index
    %0 = vector.load %arg1[%c0, %c0_0] : memref<8x32xf32, #tpu.memory_space<vmem>>, vector<8x32xf32>
    %1 = arith.truncf %0 : vector<8x32xf32> to vector<8x32xbf16>
    %c0_1 = arith.constant 0 : index
    %c0_2 = arith.constant 0 : index
    %2 = vector.load %arg2[%c0_1, %c0_2] : memref<32x256xbf16, #tpu.memory_space<vmem>>, vector<32x256xbf16>
    %cst = arith.constant dense<0.000000e+00> : vector<8x256xf32>
    %3 = tpu.matmul %1, %2, %cst {dimension_numbers = #tpu.dot_dimension_numbers<[1], [0], [0], [1], [0, 0, 1, 1], [], []>} : vector<8x32xbf16>, vector<32x256xbf16>, vector<8x256xf32> -> vector<8x256xf32>
    %c0_3 = arith.constant 0 : index
    %c0_4 = arith.constant 0 : index
    %4 = vector.load %arg3[%c0_3, %c0_4] : memref<1x256xf32, #tpu.memory_space<vmem>>, vector<1x256xf32>
    %5 = vector.broadcast %4 : vector<1x256xf32> to vector<8x256xf32>
    %6 = arith.addf %3, %5 : vector<8x256xf32>
    %cst_5 = arith.constant 0.000000e+00 : f32
    %7 = vector.broadcast %cst_5 : f32 to vector<8x256xf32>
    %8 = arith.maximumf %6, %7 : vector<8x256xf32>
    %9 = arith.truncf %8 : vector<8x256xf32> to vector<8x256xbf16>
    %c0_6 = arith.constant 0 : index
    %c0_7 = arith.constant 0 : index
    %10 = vector.load %arg4[%c0_6, %c0_7] : memref<256x256xbf16, #tpu.memory_space<vmem>>, vector<256x256xbf16>
    %cst_8 = arith.constant dense<0.000000e+00> : vector<8x256xf32>
    %11 = tpu.matmul %9, %10, %cst_8 {dimension_numbers = #tpu.dot_dimension_numbers<[1], [0], [0], [1], [0, 0, 1, 1], [], []>} : vector<8x256xbf16>, vector<256x256xbf16>, vector<8x256xf32> -> vector<8x256xf32>
    %c0_9 = arith.constant 0 : index
    %c0_10 = arith.constant 0 : index
    %12 = vector.load %arg5[%c0_9, %c0_10] : memref<1x256xf32, #tpu.memory_space<vmem>>, vector<1x256xf32>
    %13 = vector.broadcast %12 : vector<1x256xf32> to vector<8x256xf32>
    %14 = arith.addf %11, %13 : vector<8x256xf32>
    %cst_11 = arith.constant 0.000000e+00 : f32
    %15 = vector.broadcast %cst_11 : f32 to vector<8x256xf32>
    %16 = arith.maximumf %14, %15 : vector<8x256xf32>
    %c0_12 = arith.constant 0 : index
    %c0_13 = arith.constant 0 : index
    %17 = vector.load %arg6[%c0_12, %c0_13] : memref<1x256xf32, #tpu.memory_space<vmem>>, vector<1x256xf32>
    %18 = vector.broadcast %17 : vector<1x256xf32> to vector<8x256xf32>
    %19 = arith.mulf %16, %18 : vector<8x256xf32>
    %cst_14 = arith.constant dense<0.000000e+00> : vector<8xf32>
    %20 = vector.multi_reduction <add>, %19, %cst_14 [1] : vector<8x256xf32> to vector<8xf32>
    %21 = vector.shape_cast %20 : vector<8xf32> to vector<8x1xf32>
    %c0_15 = arith.constant 0 : index
    %c0_16 = arith.constant 0 : index
    %22 = vector.load %arg7[%c0_15, %c0_16] : memref<1x1xf32, #tpu.memory_space<vmem>>, vector<1x1xf32>
    %23 = vector.broadcast %22 : vector<1x1xf32> to vector<8x1xf32>
    %24 = arith.addf %21, %23 : vector<8x1xf32>
    %25 = vector.shape_cast %24 : vector<8x1xf32> to vector<8x1xf32>
    %26 = vector.broadcast %25 : vector<8x1xf32> to vector<8x128xf32>
    %c0_17 = arith.constant 0 : index
    %c0_18 = arith.constant 0 : index
    %27 = vector.load %arg8[%c0_17, %c0_18] : memref<8x128xf32, #tpu.memory_space<vmem>>, vector<8x128xf32>
    tpu.vector_store %arg8[%c0_17, %c0_18], %26 {strides = array<i32>} : memref<8x128xf32, #tpu.memory_space<vmem>>, vector<8x128xf32>,
    return
  }
  func.func @transform_0(%arg0: i32) -> (i32, i32) {
    %c0_i32 = arith.constant 0 : i32
    %c0_i32_0 = arith.constant 0 : i32
    return %arg0, %c0_i32 : i32, i32
  }
  func.func @transform_1(%arg0: i32) -> (i32, i32) {
    %c0_i32 = arith.constant 0 : i32
    %c0_i32_0 = arith.constant 0 : i32
    %c0_i32_1 = arith.constant 0 : i32
    return %c0_i32, %c0_i32_0 : i32, i32
  }
  func.func @transform_2(%arg0: i32) -> (i32, i32) {
    %c0_i32 = arith.constant 0 : i32
    %c0_i32_0 = arith.constant 0 : i32
    %c0_i32_1 = arith.constant 0 : i32
    return %c0_i32, %c0_i32_0 : i32, i32
  }
  func.func @transform_3(%arg0: i32) -> (i32, i32) {
    %c0_i32 = arith.constant 0 : i32
    %c0_i32_0 = arith.constant 0 : i32
    %c0_i32_1 = arith.constant 0 : i32
    return %c0_i32, %c0_i32_0 : i32, i32
  }
  func.func @transform_4(%arg0: i32) -> (i32, i32) {
    %c0_i32 = arith.constant 0 : i32
    %c0_i32_0 = arith.constant 0 : i32
    %c0_i32_1 = arith.constant 0 : i32
    return %c0_i32, %c0_i32_0 : i32, i32
  }
  func.func @transform_5(%arg0: i32) -> (i32, i32) {
    %c0_i32 = arith.constant 0 : i32
    %c0_i32_0 = arith.constant 0 : i32
    %c0_i32_1 = arith.constant 0 : i32
    return %c0_i32, %c0_i32_0 : i32, i32
  }
  func.func @transform_6(%arg0: i32) -> (i32, i32) {
    %c0_i32 = arith.constant 0 : i32
    %c0_i32_0 = arith.constant 0 : i32
    %c0_i32_1 = arith.constant 0 : i32
    return %c0_i32, %c0_i32_0 : i32, i32
  }
  func.func @transform_7(%arg0: i32) -> (i32, i32) {
    %c0_i32 = arith.constant 0 : i32
    %c0_i32_0 = arith.constant 0 : i32
    return %arg0, %c0_i32 : i32, i32
  }
}

</mosaic_0001>

<llo_original>
// kernel: tpu_custom_call.1
$region0: #{tpu_custom_call.1}
  #allocation0 [shape = 'u32[]', space=smem, size = 0x4, offset = 0x4, fixed_abs, tag = 'smem constant byte address 0x4 - core index']
  #allocation1 [shape = 'u32[144,128]{1,0:T(1,128)}', space=vmem, size = 0x12000, scoped, tag = 'internal scratch']
  #allocation2 [shape = 'f32[1,1]{1,0:T(1,128)S(1)}', space=vmem, size = 0x200, scoped, tag = 'scoped memory for tpu_custom_call.1']
  %s0 = inlined_call_operand.hbm [shape: f32[8,32], index: 0, kind: input, shape index: {}]
  %s1 = inlined_call_operand.hbm [shape: bf16[32,256], index: 1, kind: input, shape index: {}]
  %s2 = inlined_call_operand.vmem [shape: f32[1,256], index: 2, kind: input, shape index: {}]
  %s3 = inlined_call_operand.hbm [shape: bf16[256,256], index: 3, kind: input, shape index: {}]
  %s4 = inlined_call_operand.vmem [shape: f32[1,256], index: 4, kind: input, shape index: {}]
  %s5 = inlined_call_operand.vmem [shape: f32[1,256], index: 5, kind: input, shape index: {}]
  %s6 = inlined_call_operand.<no memory space> [shape: f32[1,1], index: 6, kind: input, shape index: {}]
  %s7 = inlined_call_operand.hbm [shape: f32[8,128], index: 7, kind: output, shape index: {}]
  %s8 = sld [smem:[#allocation0]]
  $region50: #{tpu_custom_call.1} parent=0
    _
  %s10 = ssub.s32 1, %s8
  %s11 = scalar_select 0, %s10, %s8
  %v12 = vstv %s6
  %13 = vst [vmem:[#allocation2] sm:$0x1] %v12
  $region1: #{tpu_custom_call.1} parent=0
    #allocation3 [shape = 'u8[4096]{0}', space=vmem, size = 0x1000, scoped, tag = 'input window, operand 0, single buffered']
    #allocation4 [shape = 's32[1]{0}', space=sflag, size = 0x4, scoped, tag = 'scoped memory for tpu_custom_call.1']
    #allocation5 [shape = 's32[1]{0}', space=sflag, size = 0x4, scoped, tag = 'scoped memory for tpu_custom_call.1']
    #allocation6 [shape = 'u8[16384]{0}', space=vmem, size = 0x4000, scoped, tag = 'input window, operand 1, single buffered']
    #allocation7 [shape = 's32[1]{0}', space=sflag, size = 0x4, scoped, tag = 'scoped memory for tpu_custom_call.1']
    #allocation8 [shape = 'u8[131072]{0}', space=vmem, size = 0x20000, scoped, tag = 'input window, operand 3, single buffered']
    #allocation9 [shape = 'u8[4096]{0}', space=vmem, size = 0x1000, scoped, tag = 'output window, operand 0, single buffered']
    %14 = vsyncpa [#allocation4], 0
    %15 = vsyncpa [#allocation7], 0
    %16 = vsyncpa [#allocation5], 0
    // Predicated region
    $region2: #{tpu_custom_call.1} parent=1 // pred_check
      _
    $region3: #{tpu_custom_call.1} parent=1 // pred_check_branch
      %18 = sbr.rel (0) target = $region5
    $region4: #{tpu_custom_call.1} parent=1 // pred_region
      %s20 = ssub.s32 128, 128
      %21 = vsyncadd [#allocation4], %s20
      %s23 = sshll.u32 [#allocation3], 4
      %s24 = int_to_ptr.vmem [resolvable:$true] %s23
      %26 = dma.hbm_to_vmem [thread:$0]  %s0, 128, %s24, [#allocation4]
    $region5: #{tpu_custom_call.1} parent=1 // pred_fallthru
      _
    // Predicated region
    $region6: #{tpu_custom_call.1} parent=1 // pred_check
      _
    $region7: #{tpu_custom_call.1} parent=1 // pred_check_branch
      %28 = sbr.rel (0) target = $region9
    $region8: #{tpu_custom_call.1} parent=1 // pred_region
      %s30 = ssub.s32 512, 512
      %31 = vsyncadd [#allocation7], %s30
      %s32 = sshll.u32 [#allocation6], 4
      %s33 = int_to_ptr.vmem [resolvable:$true] %s32
      %38 = dma.hbm_to_vmem [thread:$0]  %s1, 512, %s33, [#allocation7], 128, 128, 8
    $region9: #{tpu_custom_call.1} parent=1 // pred_fallthru
      _
    // Predicated region
    $region10: #{tpu_custom_call.1} parent=1 // pred_check
      _
    $region11: #{tpu_custom_call.1} parent=1 // pred_check_branch
      %40 = sbr.rel (0) target = $region13
    $region12: #{tpu_custom_call.1} parent=1 // pred_region
      _
    $region13: #{tpu_custom_call.1} parent=1 // pred_fallthru
      _
    // Predicated region
    $region14: #{tpu_custom_call.1} parent=1 // pred_check
      _
    $region15: #{tpu_custom_call.1} parent=1 // pred_check_branch
      %42 = sbr.rel (0) target = $region17
    $region16: #{tpu_custom_call.1} parent=1 // pred_region
      %s44 = ssub.s32 4096, 4096
      %45 = vsyncadd [#allocation7], %s44
      %s46 = sshll.u32 [#allocation8], 4
      %s47 = int_to_ptr.vmem [resolvable:$true] %s46
      %52 = dma.hbm_to_vmem [thread:$0]  %s3, 4096, %s47, [#allocation7], 128, 128, 8
    $region17: #{tpu_custom_call.1} parent=1 // pred_fallthru
      _
    // Predicated region
    $region18: #{tpu_custom_call.1} parent=1 // pred_check
      _
    $region19: #{tpu_custom_call.1} parent=1 // pred_check_branch
      %54 = sbr.rel (0) target = $region21
    $region20: #{tpu_custom_call.1} parent=1 // pred_region
      _
    $region21: #{tpu_custom_call.1} parent=1 // pred_fallthru
      _
    // Predicated region
    $region22: #{tpu_custom_call.1} parent=1 // pred_check
      _
    $region23: #{tpu_custom_call.1} parent=1 // pred_check_branch
      %56 = sbr.rel (0) target = $region25
    $region24: #{tpu_custom_call.1} parent=1 // pred_region
      _
    $region25: #{tpu_custom_call.1} parent=1 // pred_fallthru
      _
    // Predicated region
    $region26: #{tpu_custom_call.1} parent=1 // pred_check
      _
    $region27: #{tpu_custom_call.1} parent=1 // pred_check_branch
      %58 = sbr.rel (0) target = $region29
    $region28: #{tpu_custom_call.1} parent=1 // pred_region
      _
    $region29: #{tpu_custom_call.1} parent=1 // pred_fallthru
      _
    // Predicated region
    $region30: #{tpu_custom_call.1} parent=1 // pred_check
      _
    $region31: #{tpu_custom_call.1} parent=1 // pred_check_branch
      %60 = sbr.rel (0) target = $region33
    $region32: #{tpu_custom_call.1} parent=1 // pred_region
      %61 = dma.done [#allocation4], 128
    $region33: #{tpu_custom_call.1} parent=1 // pred_fallthru
      _
    // Predicated region
    $region34: #{tpu_custom_call.1} parent=1 // pred_check
      _
    $region35: #{tpu_custom_call.1} parent=1 // pred_check_branch
      %63 = sbr.rel (0) target = $region37
    $region36: #{tpu_custom_call.1} parent=1 // pred_region
      %64 = dma.done [#allocation7], 512
    $region37: #{tpu_custom_call.1} parent=1 // pred_fallthru
      _
    // Predicated region
    $region38: #{tpu_custom_call.1} parent=1 // pred_check
      _
    $region39: #{tpu_custom_call.1} parent=1 // pred_check_branch
      %66 = sbr.rel (0) target = $region41
    $region40: #{tpu_custom_call.1} parent=1 // pred_region
      %67 = dma.done [#allocation7], 4096
    $region41: #{tpu_custom_call.1} parent=1 // pred_fallthru
      _
    %v69 = vld [vmem:[#allocation3] sm:$0xff]
    %v70 = vpack.c.bf16 %v69, %v69
    %v71 = vld [vmem:[#allocation6] sm:$0xff]
    %v72 = vld [vmem:[#allocation6 + $0x8] sm:$0xff]
    %v73 = vld [vmem:[#allocation6 + $0x10] sm:$0xff]
    %v74 = vld [vmem:[#allocation6 + $0x18] sm:$0xff]
    %v75 = vld [vmem:[%s2] sm:$0x3]
    %v77 = vlaneseq
    %v78 = vshrl.u32 %v77, 7
    %v79 = vsub.s32 0, %v78
    %v80 = vrot.slane %v75, %v79
    %v81 = vlaneseq
    %v82 = vshrl.u32 %v81, 7
    %v83 = vsub.s32 1, %v82
    %v84 = vrot.slane %v75, %v83
    %v91 = vunpack.c.l.b16 %v71
    %v92 = vunpack.c.h.b16 %v71
    %v93 = vunpack.c.l.b16 %v72
    %v94 = vunpack.c.h.b16 %v72
    %v95 = vunpack.c.l.b16 %v73
    %v96 = vunpack.c.h.b16 %v73
    %v97 = vunpack.c.l.b16 %v74
    %v98 = vunpack.c.h.b16 %v74
    %v99 = vpack.c.b16 %v93, %v91
    %v100 = vpack.c.b16 %v94, %v92
    %v101 = vpack.c.b16 %v97, %v95
    %v102 = vpack.c.b16 %v98, %v96
    %vm107 = vcmask 261120
    %v109 = vsel %vm107, %v70, 0
    %111 = vmatprep.subr.bf16.mxu0 0
    %112 = vmatpush1.bf16.msra.mxu0 0
    %113 = vmatprep.subr.bf16.mxu0 0
    %114 = vmatpush1.bf16.msra.mxu0 0
    %115 = vmatprep.subr.bf16.mxu0 0
    %116 = vmatpush1.bf16.msra.mxu0 0
    %117 = vmatprep.subr.bf16.mxu0 0
    %118 = vmatpush1.bf16.msra.mxu0 0
    %119 = vmatprep.subr.bf16.mxu0 0
    %120 = vmatpush1.bf16.msra.mxu0 0
    %121 = vmatprep.subr.bf16.mxu0 0
    %122 = vmatpush1.bf16.msra.mxu0 0
    %123 = vmatprep.subr.bf16.mxu0 %v102
    %124 = vmatpush1.bf16.msra.mxu0 %v101
    %125 = vmatprep.subr.bf16.mxu0 %v100
    %126 = vmatpush1.bf16.msra.mxu0 %v99
    %127 = vmatprep.subr.bf16.mxu0 0
    %128 = vmatpush2.bf16.msra.mxu0 0
    %129 = vmatprep.subr.bf16.mxu0 0
    %130 = vmatpush2.bf16.msra.mxu0 0
    %131 = vmatprep.subr.bf16.mxu0 0
    %132 = vmatpush2.bf16.msra.mxu0 0
    %133 = vmatprep.subr.bf16.mxu0 0
    %134 = vmatpush2.bf16.msra.mxu0 0
    %135 = vmatprep.subr.bf16.mxu0 0
    %136 = vmatpush2.bf16.msra.mxu0 0
    %137 = vmatprep.subr.bf16.mxu0 0
    %138 = vmatpush2.bf16.msra.mxu0 0
    %139 = vmatprep.subr.bf16.mxu0 0
    %140 = vmatpush2.bf16.msra.mxu0 0
    %141 = vmatprep.subr.bf16.mxu0 0
    %142 = vmatpush2.bf16.msra.mxu0 0
    %143 = vmatprep.mubr.bf16.mxu0 0
    %144 = vmatmul.mubr.bf16.gmra.mxu0 %v109
    %v145 = vpop.f32.mrf.mxu0
    %v146 = vadd.f32 %v80, %v145
    %v147 = vpop.f32.mrf.mxu0
    %v148 = vadd.f32 %v84, %v147
    %v149 = vpop.f32.mrf.mxu0
    %v150 = vpop.f32.mrf.mxu0
    %151 = vdwg.mxu0
    %v152 = vmax.f32 %v146, 0.0
    %v153 = vmax.f32 %v148, 0.0
    %v154 = vpack.c.bf16 %v152, %v152
    %v155 = vpack.c.bf16 %v153, %v153
    %v156 = vld [vmem:[#allocation8] sm:$0xff]
    %v157 = vld [vmem:[#allocation8 + $0x8] sm:$0xff]
    %v158 = vld [vmem:[#allocation8 + $0x10] sm:$0xff]
    %v159 = vld [vmem:[#allocation8 + $0x18] sm:$0xff]
    %v160 = vld [vmem:[#allocation8 + $0x20] sm:$0xff]
    %v161 = vld [vmem:[#allocation8 + $0x28] sm:$0xff]
    %v162 = vld [vmem:[#allocation8 + $0x30] sm:$0xff]
    %v163 = vld [vmem:[#allocation8 + $0x38] sm:$0xff]
    %v164 = vld [vmem:[#allocation8 + $0x40] sm:$0xff]
    %v165 = vld [vmem:[#allocation8 + $0x48] sm:$0xff]
    %v166 = vld [vmem:[#allocation8 + $0x50] sm:$0xff]
    %v167 = vld [vmem:[#allocation8 + $0x58] sm:$0xff]
    %v168 = vld [vmem:[#allocation8 + $0x60] sm:$0xff]
    %v169 = vld [vmem:[#allocation8 + $0x68] sm:$0xff]
    %v170 = vld [vmem:[#allocation8 + $0x70] sm:$0xff]
    %v171 = vld [vmem:[#allocation8 + $0x78] sm:$0xff]
    %v172 = vld [vmem:[#allocation8 + $0x80] sm:$0xff]
    %v173 = vld [vmem:[#allocation8 + $0x88] sm:$0xff]
    %v174 = vld [vmem:[#allocation8 + $0x90] sm:$0xff]
    %v175 = vld [vmem:[#allocation8 + $0x98] sm:$0xff]
    %v176 = vld [vmem:[#allocation8 + $0xa0] sm:$0xff]
    %v177 = vld [vmem:[#allocation8 + $0xa8] sm:$0xff]
    %v178 = vld [vmem:[#allocation8 + $0xb0] sm:$0xff]
    %v179 = vld [vmem:[#allocation8 + $0xb8] sm:$0xff]
    %v180 = vld [vmem:[#allocation8 + $0xc0] sm:$0xff]
    %v181 = vld [vmem:[#allocation8 + $0xc8] sm:$0xff]
    %v182 = vld [vmem:[#allocation8 + $0xd0] sm:$0xff]
    %v183 = vld [vmem:[#allocation8 + $0xd8] sm:$0xff]
    %v184 = vld [vmem:[#allocation8 + $0xe0] sm:$0xff]
    %v185 = vld [vmem:[#allocation8 + $0xe8] sm:$0xff]
    %v186 = vld [vmem:[#allocation8 + $0xf0] sm:$0xff]
    %v187 = vld [vmem:[#allocation8 + $0xf8] sm:$0xff]
    %v188 = vld [vmem:[%s4] sm:$0x3]
    %v190 = vlaneseq
    %v191 = vshrl.u32 %v190, 7
    %v192 = vsub.s32 0, %v191
    %v193 = vrot.slane %v188, %v192
    %v194 = vlaneseq
    %v195 = vshrl.u32 %v194, 7
    %v196 = vsub.s32 1, %v195
    %v197 = vrot.slane %v188, %v196
    %v232 = vunpack.c.l.b16 %v156
    %v233 = vunpack.c.h.b16 %v156
    %v234 = vunpack.c.l.b16 %v157
    %v235 = vunpack.c.h.b16 %v157
    %v236 = vunpack.c.l.b16 %v158
    %v237 = vunpack.c.h.b16 %v158
    %v238 = vunpack.c.l.b16 %v159
    %v239 = vunpack.c.h.b16 %v159
    %v240 = vunpack.c.l.b16 %v160
    %v241 = vunpack.c.h.b16 %v160
    %v242 = vunpack.c.l.b16 %v161
    %v243 = vunpack.c.h.b16 %v161
    %v244 = vunpack.c.l.b16 %v162
    %v245 = vunpack.c.h.b16 %v162
    %v246 = vunpack.c.l.b16 %v163
    %v247 = vunpack.c.h.b16 %v163
    %v248 = vunpack.c.l.b16 %v164
    %v249 = vunpack.c.h.b16 %v164
    %v250 = vunpack.c.l.b16 %v165
    %v251 = vunpack.c.h.b16 %v165
    %v252 = vunpack.c.l.b16 %v166
    %v253 = vunpack.c.h.b16 %v166
    %v254 = vunpack.c.l.b16 %v167
    %v255 = vunpack.c.h.b16 %v167
    %v256 = vunpack.c.l.b16 %v168
    %v257 = vunpack.c.h.b16 %v168
    %v258 = vunpack.c.l.b16 %v169
    %v259 = vunpack.c.h.b16 %v169
    %v260 = vunpack.c.l.b16 %v170
    %v261 = vunpack.c.h.b16 %v170
    %v262 = vunpack.c.l.b16 %v171
    %v263 = vunpack.c.h.b16 %v171
    %v264 = vunpack.c.l.b16 %v172
    %v265 = vunpack.c.h.b16 %v172
    %v266 = vunpack.c.l.b16 %v173
    %v267 = vunpack.c.h.b16 %v173
    %v268 = vunpack.c.l.b16 %v174
    %v269 = vunpack.c.h.b16 %v174
    %v270 = vunpack.c.l.b16 %v175
    %v271 = vunpack.c.h.b16 %v175
    %v272 = vunpack.c.l.b16 %v176
    %v273 = vunpack.c.h.b16 %v176
    %v274 = vunpack.c.l.b16 %v177
    %v275 = vunpack.c.h.b16 %v177
    %v276 = vunpack.c.l.b16 %v178
    %v277 = vunpack.c.h.b16 %v178
    %v278 = vunpack.c.l.b16 %v179
    %v279 = vunpack.c.h.b16 %v179
    %v280 = vunpack.c.l.b16 %v180
    %v281 = vunpack.c.h.b16 %v180
    %v282 = vunpack.c.l.b16 %v181
    %v283 = vunpack.c.h.b16 %v181
    %v284 = vunpack.c.l.b16 %v182
    %v285 = vunpack.c.h.b16 %v182
    %v286 = vunpack.c.l.b16 %v183
    %v287 = vunpack.c.h.b16 %v183
    %v288 = vunpack.c.l.b16 %v184
    %v289 = vunpack.c.h.b16 %v184
    %v290 = vunpack.c.l.b16 %v185
    %v291 = vunpack.c.h.b16 %v185
    %v292 = vunpack.c.l.b16 %v186
    %v293 = vunpack.c.h.b16 %v186
    %v294 = vunpack.c.l.b16 %v187
    %v295 = vunpack.c.h.b16 %v187
    %v296 = vpack.c.b16 %v234, %v232
    %v297 = vpack.c.b16 %v235, %v233
    %v298 = vpack.c.b16 %v238, %v236
    %v299 = vpack.c.b16 %v239, %v237
    %v300 = vpack.c.b16 %v242, %v240
    %v301 = vpack.c.b16 %v243, %v241
    %v302 = vpack.c.b16 %v246, %v244
    %v303 = vpack.c.b16 %v247, %v245
    %v304 = vpack.c.b16 %v250, %v248
    %v305 = vpack.c.b16 %v251, %v249
    %v306 = vpack.c.b16 %v254, %v252
    %v307 = vpack.c.b16 %v255, %v253
    %v308 = vpack.c.b16 %v258, %v256
    %v309 = vpack.c.b16 %v259, %v257
    %v310 = vpack.c.b16 %v262, %v260
    %v311 = vpack.c.b16 %v263, %v261
    %v312 = vpack.c.b16 %v266, %v264
    %v313 = vpack.c.b16 %v267, %v265
    %v314 = vpack.c.b16 %v270, %v268
    %v315 = vpack.c.b16 %v271, %v269
    %v316 = vpack.c.b16 %v274, %v272
    %v317 = vpack.c.b16 %v275, %v273
    %v318 = vpack.c.b16 %v278, %v276
    %v319 = vpack.c.b16 %v279, %v277
    %v320 = vpack.c.b16 %v282, %v280
    %v321 = vpack.c.b16 %v283, %v281
    %v322 = vpack.c.b16 %v286, %v284
    %v323 = vpack.c.b16 %v287, %v285
    %v324 = vpack.c.b16 %v290, %v288
    %v325 = vpack.c.b16 %v291, %v289
    %v326 = vpack.c.b16 %v294, %v292
    %v327 = vpack.c.b16 %v295, %v293
    %360 = vmatprep.subr.bf16.mxu0 %v311
    %361 = vmatpush1.bf16.msra.mxu0 %v310
    %362 = vmatprep.subr.bf16.mxu0 %v309
    %363 = vmatpush1.bf16.msra.mxu0 %v308
    %364 = vmatprep.subr.bf16.mxu0 %v307
    %365 = vmatpush1.bf16.msra.mxu0 %v306
    %366 = vmatprep.subr.bf16.mxu0 %v305
    %367 = vmatpush1.bf16.msra.mxu0 %v304
    %368 = vmatprep.subr.bf16.mxu0 %v303
    %369 = vmatpush1.bf16.msra.mxu0 %v302
    %370 = vmatprep.subr.bf16.mxu0 %v301
    %371 = vmatpush1.bf16.msra.mxu0 %v300
    %372 = vmatprep.subr.bf16.mxu0 %v299
    %373 = vmatpush1.bf16.msra.mxu0 %v298
    %374 = vmatprep.subr.bf16.mxu0 %v297
    %375 = vmatpush1.bf16.msra.mxu0 %v296
    %376 = vmatprep.subr.bf16.mxu0 %v327
    %377 = vmatpush2.bf16.msra.mxu0 %v326
    %378 = vmatprep.subr.bf16.mxu0 %v325
    %379 = vmatpush2.bf16.msra.mxu0 %v324
    %380 = vmatprep.subr.bf16.mxu0 %v323
    %381 = vmatpush2.bf16.msra.mxu0 %v322
    %382 = vmatprep.subr.bf16.mxu0 %v321
    %383 = vmatpush2.bf16.msra.mxu0 %v320
    %384 = vmatprep.subr.bf16.mxu0 %v319
    %385 = vmatpush2.bf16.msra.mxu0 %v318
    %386 = vmatprep.subr.bf16.mxu0 %v317
    %387 = vmatpush2.bf16.msra.mxu0 %v316
    %388 = vmatprep.subr.bf16.mxu0 %v315
    %389 = vmatpush2.bf16.msra.mxu0 %v314
    %390 = vmatprep.subr.bf16.mxu0 %v313
    %391 = vmatpush2.bf16.msra.mxu0 %v312
    %392 = vmatprep.mubr.bf16.mxu0 %v155
    %393 = vmatmul.mubr.bf16.gmra.mxu0 %v154
    %v394 = vpop.f32.mrf.mxu0
    %v395 = vadd.f32 %v193, %v394
    %v396 = vpop.f32.mrf.mxu0
    %v397 = vadd.f32 %v197, %v396
    %v398 = vpop.f32.mrf.mxu0
    %v399 = vpop.f32.mrf.mxu0
    %400 = vdwg.mxu0
    %v401 = vmax.f32 %v395, 0.0
    %v402 = vmax.f32 %v397, 0.0
    %v403 = vld [vmem:[%s5] sm:$0x3]
    %v405 = vlaneseq
    %v406 = vshrl.u32 %v405, 7
    %v407 = vsub.s32 0, %v406
    %v408 = vrot.slane %v403, %v407
    %v409 = vlaneseq
    %v410 = vshrl.u32 %v409, 7
    %v411 = vsub.s32 1, %v410
    %v412 = vrot.slane %v403, %v411
    %v415 = vmul.f32 %v401, %v408
    %v416 = vmul.f32 %v402, %v412
    %v417 = vadd.f32 %v415, %v416
    %418 = vadd.xlane.f32.xlu0 %v417
    %v419 = vpop.xlane.xlu0 %418
    %v420 = vld [vmem:[#allocation2] sm:$0x1]
    %v422 = vlaneseq
    %v423 = vshrl.u32 %v422, 7
    %v424 = vsub.s32 0, %v423
    %v425 = vrot.slane %v420, %v424
    %v427 = vadd.f32 %v419, %v425
    %429 = vset.pattern.permute.xlu0 0
    %430 = vperm.xlu0 %429, %v427
    %v431 = vpop.permute.xlu0 %430
    %433 = vst [vmem:[#allocation9] sm:$0xff] %v431
    // Predicated region
    $region42: #{tpu_custom_call.1} parent=1 // pred_check
      _
    $region43: #{tpu_custom_call.1} parent=1 // pred_check_branch
      %435 = sbr.rel (0) target = $region45
    $region44: #{tpu_custom_call.1} parent=1 // pred_region
      %s437 = ssub.s32 128, 128
      %438 = vsyncadd [#allocation5], %s437
      %s440 = sshll.u32 [#allocation9], 4
      %s441 = int_to_ptr.vmem [resolvable:$true] %s440
      %443 = dma.vmem_to_hbm [thread:$0]  %s441, 128, %s7, [#allocation5]
    $region45: #{tpu_custom_call.1} parent=1 // pred_fallthru
      _
    // Predicated region
    $region46: #{tpu_custom_call.1} parent=1 // pred_check
      _
    $region47: #{tpu_custom_call.1} parent=1 // pred_check_branch
      %445 = sbr.rel (0) target = $region49
    $region48: #{tpu_custom_call.1} parent=1 // pred_region
      %446 = dma.done [#allocation5], 128
    $region49: #{tpu_custom_call.1} parent=1 // pred_fallthru
      _
    %447 = vsyncpa [#allocation4], 1
    %448 = vsyncpa [#allocation7], 1
    %449 = vsyncpa [#allocation5], 1

</llo_original>
